<compile_context>
chip_gen: v5e
topology: v5e:2x2
jax: 0.10.0
libtpu: 0.0.40
codegen_flags: <defaults>
</compile_context>

<pallas_src>
import functools

import jax
import jax.numpy as jnp
from jax.experimental import pallas as pl
from jax.experimental.pallas import tpu as pltpu

BN_EPS = 1e-5
IMAGENET_MEAN = jnp.array([0.485, 0.456, 0.406], jnp.float32)
IMAGENET_STD = jnp.array([0.229, 0.224, 0.225], jnp.float32)

# Scoped VMEM cap: below v7x's 64 MiB physical, comfortably below v5e/v6e 128 MiB.
_VMEM_LIMIT = 48 * 1024 * 1024


def _round_up(x, m):
    return (x + m - 1) // m * m


# --------------------------------------------------------------------------
# Tiled MXU matmul (bf16 operands, f32 accumulation).  Optionally fuses the
# BatchNorm per-channel sum / sum-of-squares into the last-k writeback.
# --------------------------------------------------------------------------
def _mm_kernel(a_ref, b_ref, o_ref, acc_ref):
    @pl.when(pl.program_id(2) == 0)
    def _():
        acc_ref[...] = jnp.zeros_like(acc_ref)

    acc_ref[...] += jnp.dot(a_ref[...], b_ref[...],
                            preferred_element_type=jnp.float32)

    @pl.when(pl.program_id(2) == pl.num_programs(2) - 1)
    def _():
        o_ref[...] = acc_ref[...]


def _mm_stats_kernel(a_ref, b_ref, o_ref, s_ref, acc_ref):
    @pl.when(pl.program_id(2) == 0)
    def _():
        acc_ref[...] = jnp.zeros_like(acc_ref)

    acc_ref[...] += jnp.dot(a_ref[...], b_ref[...],
                            preferred_element_type=jnp.float32)

    @pl.when(pl.program_id(2) == pl.num_programs(2) - 1)
    def _():
        acc = acc_ref[...]
        o_ref[...] = acc
        ssum = jnp.sum(acc, axis=0, keepdims=True)          # (1, TN)
        ssq = jnp.sum(acc * acc, axis=0, keepdims=True)      # (1, TN)
        s_ref[...] = jnp.concatenate([ssum, ssq], axis=0)[None]   # (1, 2, TN)


def _matmul_tiles(M, K, N):
    # M tile: multiple of 16 (bf16 sublane friendly); cap 256.
    if M > 256:
        TM, Mp = 256, _round_up(M, 256)
    else:
        Mp = _round_up(M, 16)
        TM = Mp
    # K tile: pad to the lane multiple, pick the largest tile that divides it
    # (zero extra K padding beyond the 128 round-up).
    Kp = _round_up(K, 128)
    TK = 128
    for cand in (512, 384, 256, 128):
        if Kp % cand == 0:
            TK = cand
            break
    # N tile: lane-dense multiples of 128.
    Np = _round_up(N, 128)
    TN = 256 if Np % 256 == 0 else 128
    return (TM, TK, TN), (Mp, Kp, Np)


def pallas_matmul(a, b, compute_stats=False):
    """(M,K)@(K,N) -> f32.  bf16 operands on the MXU, f32 VMEM accumulator.

    When compute_stats, also returns (2, N): per-column [sum, sum_sq] over the
    M rows (zero-padded rows contribute nothing, so these are exact batch
    statistics for the real rows)."""
    M, K = a.shape
    K2, N = b.shape
    assert K == K2
    (TM, TK, TN), (Mp, Kp, Np) = _matmul_tiles(M, K, N)
    a_p = jnp.pad(a.astype(jnp.bfloat16), ((0, Mp - M), (0, Kp - K)))
    b_p = jnp.pad(b.astype(jnp.bfloat16), ((0, Kp - K), (0, Np - N)))
    gm, gn, gk = Mp // TM, Np // TN, Kp // TK

    in_specs = [pl.BlockSpec((TM, TK), lambda i, j, k: (i, k)),
                pl.BlockSpec((TK, TN), lambda i, j, k: (k, j))]
    cparams = pltpu.CompilerParams(
        dimension_semantics=("parallel", "parallel", "arbitrary"),
        vmem_limit_bytes=_VMEM_LIMIT)
    scratch = [pltpu.VMEM((TM, TN), jnp.float32)]

    if compute_stats:
        out, part = pl.pallas_call(
            _mm_stats_kernel,
            out_shape=(jax.ShapeDtypeStruct((Mp, Np), jnp.float32),
                       jax.ShapeDtypeStruct((gm, 2, Np), jnp.float32)),
            grid=(gm, gn, gk),
            in_specs=in_specs,
            out_specs=(pl.BlockSpec((TM, TN), lambda i, j, k: (i, j)),
                       pl.BlockSpec((1, 2, TN), lambda i, j, k: (i, 0, j))),
            scratch_shapes=scratch,
            compiler_params=cparams,
        )(a_p, b_p)
        stats = jnp.sum(part, axis=0)[:, :N]            # (2, N)
        return out[:M, :N], stats

    out = pl.pallas_call(
        _mm_kernel,
        out_shape=jax.ShapeDtypeStruct((Mp, Np), jnp.float32),
        grid=(gm, gn, gk),
        in_specs=in_specs,
        out_specs=pl.BlockSpec((TM, TN), lambda i, j, k: (i, j)),
        scratch_shapes=scratch,
        compiler_params=cparams,
    )(a_p, b_p)
    return out[:M, :N]


# --------------------------------------------------------------------------
# Row-tiled elementwise kernels: per-channel affine (+ReLU) (+residual add).
# --------------------------------------------------------------------------
def _affine_kernel(x_ref, s_ref, b_ref, o_ref, *, relu):
    y = x_ref[...] * s_ref[...] + b_ref[...]
    if relu:
        y = jnp.maximum(y, 0.0)
    o_ref[...] = y


def _affine_add_relu_kernel(x_ref, r_ref, s_ref, b_ref, o_ref):
    o_ref[...] = jnp.maximum(x_ref[...] * s_ref[...] + b_ref[...] + r_ref[...], 0.0)


def _affine_apply(x2d, scale, bias, *, relu, residual=None):
    """y = x*scale + bias (+ residual) (+ ReLU), per-channel, tiled over rows.

    Narrow-channel slabs (C divides 128) are reshaped to 128-lane-dense rows so
    the output stores are full-width (unmasked) vst."""
    n_rows, C = x2d.shape
    f = 128 // C if (C < 128 and 128 % C == 0) else 1
    C2 = C * f
    rows = -(-n_rows // f)
    TR = min(512, _round_up(rows, 8))
    rows_p = _round_up(rows, TR)
    pad_rows = rows_p * f - n_rows

    def prep(z):
        return jnp.pad(z.astype(jnp.float32), ((0, pad_rows), (0, 0))).reshape(rows_p, C2)

    args = [prep(x2d)]
    n_x = 1
    if residual is not None:
        args.append(prep(residual))
        n_x = 2
    args.append(jnp.tile(scale.astype(jnp.float32).reshape(1, C), (1, f)))
    args.append(jnp.tile(bias.astype(jnp.float32).reshape(1, C), (1, f)))

    kern = (_affine_add_relu_kernel if residual is not None
            else functools.partial(_affine_kernel, relu=relu))
    out = pl.pallas_call(
        kern,
        out_shape=jax.ShapeDtypeStruct((rows_p, C2), jnp.float32),
        grid=(rows_p // TR,),
        in_specs=[pl.BlockSpec((TR, C2), lambda i: (i, 0))] * n_x
        + [pl.BlockSpec((1, C2), lambda i: (0, 0))] * 2,
        out_specs=pl.BlockSpec((TR, C2), lambda i: (i, 0)),
        compiler_params=pltpu.CompilerParams(
            dimension_semantics=("parallel",),
            vmem_limit_bytes=_VMEM_LIMIT),
    )(*args)
    return out.reshape(rows_p * f, C)[:n_rows]


# --------------------------------------------------------------------------
# 3x3 / stride-2 maxpool: running max over the 9 shifted windows inside one
# kernel (no 9x HBM patch materialization); stride-2 subsample in glue.
# --------------------------------------------------------------------------
def _maxpool_kernel(x_ref, o_ref, *, k):
    H = o_ref.shape[1]
    W = o_ref.shape[2]
    acc = x_ref[:, 0:H, 0:W, :]
    for i in range(k):
        for j in range(k):
            if i == 0 and j == 0:
                continue
            acc = jnp.maximum(acc, x_ref[:, i:i + H, j:j + W, :])
    o_ref[...] = acc


def maxpool_3x3_s2(x):
    B, H, W, C = x.shape
    xp = jnp.pad(x, ((0, 0), (1, 1), (1, 1), (0, 0)),
                 constant_values=-jnp.inf)
    dense = pl.pallas_call(
        functools.partial(_maxpool_kernel, k=3),
        out_shape=jax.ShapeDtypeStruct((B, H, W, C), jnp.float32),
        grid=(B,),
        in_specs=[pl.BlockSpec((1, H + 2, W + 2, C), lambda b: (b, 0, 0, 0))],
        out_specs=pl.BlockSpec((1, H, W, C), lambda b: (b, 0, 0, 0)),
        compiler_params=pltpu.CompilerParams(
            dimension_semantics=("parallel",),
            vmem_limit_bytes=_VMEM_LIMIT),
    )(xp)
    return dense[:, ::2, ::2, :]


# --------------------------------------------------------------------------
# Convolution = im2col GEMM (bf16 patches) with fused BN statistics.
# --------------------------------------------------------------------------
def _extract_patches(x, kh, kw, stride, pad):
    """x: (B,H,W,C) -> (B,Ho,Wo,kh*kw,C) patches (window-major, channel-minor)."""
    B, H, W, C = x.shape
    xp = jnp.pad(x, ((0, 0), (pad, pad), (pad, pad), (0, 0)))
    Ho = (H + 2 * pad - kh) // stride + 1
    Wo = (W + 2 * pad - kw) // stride + 1
    cols = []
    for i in range(kh):
        for j in range(kw):
            sl = jax.lax.slice(
                xp,
                (0, i, j, 0),
                (B, i + (Ho - 1) * stride + 1, j + (Wo - 1) * stride + 1, C),
                (1, stride, stride, 1))
            cols.append(sl)
    patches = jnp.stack(cols, axis=3)  # (B, Ho, Wo, kh*kw, C)
    return patches, Ho, Wo


def conv2d(x, w, stride, pad, *, compute_stats=True):
    """x NHWC f32, w (Cout, Cin, kh, kw) PyTorch layout, no bias."""
    # TODO(synk): implicit-GEMM conv (shifted BlockSpec reads of the padded
    # activation) would remove this HBM im2col entirely; the patches are
    # materialized in bf16 to halve the traffic instead.
    Cout, Cin, kh, kw = w.shape
    B = x.shape[0]
    patches, Ho, Wo = _extract_patches(x.astype(jnp.bfloat16), kh, kw, stride, pad)
    a = patches.reshape(B * Ho * Wo, kh * kw * Cin)
    bmat = jnp.transpose(w, (2, 3, 1, 0)).reshape(kh * kw * Cin, Cout)
    bmat = bmat.astype(jnp.bfloat16)
    if compute_stats:
        out, stats = pallas_matmul(a, bmat, compute_stats=True)
        return out.reshape(B, Ho, Wo, Cout), stats
    return pallas_matmul(a, bmat).reshape(B, Ho, Wo, Cout), None


def _bn_scale_bias(stats, count, gamma, beta):
    """Training-mode (batch-statistics, biased variance) BN folded into a
    per-channel affine: y = x*scale + bias."""
    mean = stats[0] / count
    var = jnp.maximum(stats[1] / count - mean * mean, 0.0)
    scale = gamma * jax.lax.rsqrt(var + BN_EPS)
    bias = beta - mean * scale
    return scale, bias


def conv_bn(x, w, gamma, beta, *, stride, pad, relu):
    out, stats = conv2d(x, w, stride, pad)
    B, Ho, Wo, C = out.shape
    scale, bias = _bn_scale_bias(stats, B * Ho * Wo, gamma, beta)
    y = _affine_apply(out.reshape(B * Ho * Wo, C), scale, bias, relu=relu)
    return y.reshape(B, Ho, Wo, C)


def conv_bn_add_relu(x, w, gamma, beta, *, identity):
    out, stats = conv2d(x, w, stride=1, pad=1)
    B, Ho, Wo, C = out.shape
    scale, bias = _bn_scale_bias(stats, B * Ho * Wo, gamma, beta)
    y = _affine_apply(out.reshape(B * Ho * Wo, C), scale, bias, relu=True,
                      residual=identity.reshape(B * Ho * Wo, C))
    return y.reshape(B, Ho, Wo, C)


# --------------------------------------------------------------------------
# Separable bilinear resize (align_corners=True) via two tiled matmuls.
# --------------------------------------------------------------------------
def _interp_matrix(out_size, in_size):
    """1-D bilinear interpolation matrix, align_corners=True (PyTorch)."""
    if in_size == 1:
        return jnp.ones((out_size, 1), jnp.float32)
    if out_size == 1:
        return jnp.zeros((1, in_size), jnp.float32).at[0, 0].set(1.0)
    src = jnp.arange(out_size, dtype=jnp.float32) * (in_size - 1) / (out_size - 1)
    i0 = jnp.clip(jnp.floor(src).astype(jnp.int32), 0, in_size - 2)
    frac = src - i0.astype(jnp.float32)
    rows = jnp.arange(out_size)
    m = jnp.zeros((out_size, in_size), jnp.float32)
    m = m.at[rows, i0].add(1.0 - frac)
    m = m.at[rows, i0 + 1].add(frac)
    return m


def bilinear_resize(x, Ho, Wo):
    """(B,Hin,Win,C) -> (B,Ho,Wo,C), separable row/col interp matmuls."""
    B, Hin, Win, C = x.shape
    if Hin != Ho:
        Rh = _interp_matrix(Ho, Hin)
        xr = x.transpose(1, 0, 2, 3).reshape(Hin, B * Win * C)
        x = pallas_matmul(Rh, xr).reshape(Ho, B, Win, C).transpose(1, 0, 2, 3)
    if Win != Wo:
        Rw = _interp_matrix(Wo, Win)
        xc = x.transpose(2, 0, 1, 3).reshape(Win, B * Ho * C)
        x = pallas_matmul(Rw, xc).reshape(Wo, B, Ho, C).transpose(1, 2, 0, 3)
    return x


# --------------------------------------------------------------------------
# ResNet-34 parameters (deterministic init; pretrained weights NOT loaded)
# --------------------------------------------------------------------------
def _init_conv(key, cout, cin, kh, kw):
    fan_in = cin * kh * kw
    return jax.random.normal(key, (cout, cin, kh, kw), jnp.float32) * (2.0 / fan_in) ** 0.5


def make_resnet34_params(key):
    keys = iter(jax.random.split(key, 64))
    params = {
        'conv1': _init_conv(next(keys), 64, 3, 7, 7),
        'bn1': (jnp.ones(64, jnp.float32), jnp.zeros(64, jnp.float32)),
    }

    def basic_block_params(cin, cout, stride):
        b = {
            'stride': stride,
            'conv1': _init_conv(next(keys), cout, cin, 3, 3),
            'bn1': (jnp.ones(cout, jnp.float32), jnp.zeros(cout, jnp.float32)),
            'conv2': _init_conv(next(keys), cout, cout, 3, 3),
            'bn2': (jnp.ones(cout, jnp.float32), jnp.zeros(cout, jnp.float32)),
        }
        if stride != 1 or cin != cout:
            b['down_conv'] = _init_conv(next(keys), cout, cin, 1, 1)
            b['down_bn'] = (jnp.ones(cout, jnp.float32), jnp.zeros(cout, jnp.float32))
        return b

    # ResNet-34 layers 1..3 (num_layers=4 never touches layer4)
    cfg = [(64, 64, 3, 1), (64, 128, 4, 2), (128, 256, 6, 2)]
    layers = []
    for cin, cout, nblocks, stride in cfg:
        blocks = [basic_block_params(cin, cout, stride)]
        for _ in range(nblocks - 1):
            blocks.append(basic_block_params(cout, cout, 1))
        layers.append(blocks)
    params['layers'] = layers
    return params


def basic_block(x, p):
    out = conv_bn(x, p['conv1'], *p['bn1'], stride=p['stride'], pad=1, relu=True)
    if 'down_conv' in p:
        identity = conv_bn(x, p['down_conv'], *p['down_bn'],
                           stride=p['stride'], pad=0, relu=False)
    else:
        identity = x
    return conv_bn_add_relu(out, p['conv2'], *p['bn2'], identity=identity)


# --------------------------------------------------------------------------
# SpatialEncoder.forward
# --------------------------------------------------------------------------
def process_input(x_nhwc):
    # x*0.5+0.5 then (x-mean)/std  ==  x*(0.5/std) + (0.5-mean)/std
    scale = 0.5 / IMAGENET_STD
    bias = (0.5 - IMAGENET_MEAN) / IMAGENET_STD
    B, H, W, C = x_nhwc.shape
    out = _affine_apply(x_nhwc.reshape(B * H * W, C), scale, bias, relu=False)
    return out.reshape(B, H, W, C)


def spatial_encoder_forward(x_nchw, params, num_layers=4, use_first_pool=True):
    """Returns (processed_x NCHW, latent NCHW, latent_scaling[2])."""
    x = jnp.transpose(x_nchw, (0, 2, 3, 1)).astype(jnp.float32)  # -> NHWC
    x = process_input(x)
    processed = x

    # stem: conv(7x7,s2) -> BN -> ReLU
    h = conv_bn(x, params['conv1'], *params['bn1'], stride=2, pad=3, relu=True)
    latents = [h]

    if num_layers > 1:
        if use_first_pool:
            h = maxpool_3x3_s2(h)
        for blk in params['layers'][0]:
            h = basic_block(h, blk)
        latents.append(h)
    if num_layers > 2:
        for blk in params['layers'][1]:
            h = basic_block(h, blk)
        latents.append(h)
    if num_layers > 3:
        for blk in params['layers'][2]:
            h = basic_block(h, blk)
        latents.append(h)
    # TODO(synk): num_layers > 4 (ResNet layer4) not built; default config uses num_layers=4.

    latent_H, latent_W = latents[0].shape[1], latents[0].shape[2]
    latents = [bilinear_resize(l, latent_H, latent_W) for l in latents]
    latent = jnp.concatenate(latents, axis=-1)            # NHWC
    latent_nchw = jnp.transpose(latent, (0, 3, 1, 2))     # (B, 512, H/2, W/2)

    ls = jnp.array([latent_nchw.shape[-1], latent_nchw.shape[-2]], jnp.float32)
    latent_scaling = ls / (ls - 1.0) * 2.0

    processed_nchw = jnp.transpose(processed, (0, 3, 1, 2))
    return processed_nchw, latent_nchw, latent_scaling


# --------------------------------------------------------------------------
if __name__ == "__main__":
    key = jax.random.PRNGKey(0)
    k_x, k_w = jax.random.split(key)

    # Small input consistent with the module: (B=2, C=3 RGB, H=16, W=16), NCHW.
    x = jax.random.normal(k_x, (2, 3, 16, 16), jnp.float32)
    params = make_resnet34_params(k_w)

    processed, latent, latent_scaling = spatial_encoder_forward(x, params)
    jax.block_until_ready((processed, latent, latent_scaling))

    assert processed.shape == (2, 3, 16, 16)
    assert latent.shape == (2, 64 + 64 + 128 + 256, 8, 8)   # latent_size = 512
    assert latent_scaling.shape == (2,)
    assert bool(jnp.all(jnp.isfinite(latent)))
    assert bool(jnp.all(jnp.isfinite(processed)))

    print("KERNEL_OK")
</pallas_src>

<mosaic_0001>
module attributes {stable_mosaic.version = 11 : i64} {
  func.func @_affine_kernel(%arg0: i32, %arg1: memref<512x3xf32, #tpu.memory_space<vmem>>, %arg2: memref<1x3xf32, #tpu.memory_space<vmem>>, %arg3: memref<1x3xf32, #tpu.memory_space<vmem>>, %arg4: memref<512x3xf32, #tpu.memory_space<vmem>>) attributes {dimension_semantics = [#tpu.dimension_semantics<parallel>], iteration_bounds = array<i64: 1>, scalar_prefetch = 0 : i64, scratch_operands = 0 : i64, tpu.core_type = #tpu.core_type<tc>, window_params = [{transform_indices = @transform_0, window_bounds = array<i64: 512, 3>}, {pipeline_mode = #tpu.pipeline_mode<synchronous>, transform_indices = @transform_1, window_bounds = array<i64: 1, 3>}, {pipeline_mode = #tpu.pipeline_mode<synchronous>, transform_indices = @transform_2, window_bounds = array<i64: 1, 3>}, {transform_indices = @transform_3, window_bounds = array<i64: 512, 3>}]} {
    %c0 = arith.constant 0 : index
    %c0_0 = arith.constant 0 : index
    %0 = vector.load %arg1[%c0, %c0_0] : memref<512x3xf32, #tpu.memory_space<vmem>>, vector<512x3xf32>
    %c0_1 = arith.constant 0 : index
    %c0_2 = arith.constant 0 : index
    %1 = vector.load %arg2[%c0_1, %c0_2] : memref<1x3xf32, #tpu.memory_space<vmem>>, vector<1x3xf32>
    %2 = vector.broadcast %1 : vector<1x3xf32> to vector<512x3xf32>
    %3 = arith.mulf %0, %2 : vector<512x3xf32>
    %c0_3 = arith.constant 0 : index
    %c0_4 = arith.constant 0 : index
    %4 = vector.load %arg3[%c0_3, %c0_4] : memref<1x3xf32, #tpu.memory_space<vmem>>, vector<1x3xf32>
    %5 = vector.broadcast %4 : vector<1x3xf32> to vector<512x3xf32>
    %6 = arith.addf %3, %5 : vector<512x3xf32>
    %c0_5 = arith.constant 0 : index
    %c0_6 = arith.constant 0 : index
    %7 = vector.load %arg4[%c0_5, %c0_6] : memref<512x3xf32, #tpu.memory_space<vmem>>, vector<512x3xf32>
    tpu.vector_store %arg4[%c0_5, %c0_6], %6 {strides = array<i32>} : memref<512x3xf32, #tpu.memory_space<vmem>>, vector<512x3xf32>,
    return
  }
  func.func @transform_0(%arg0: i32) -> (i32, i32) {
    %c0_i32 = arith.constant 0 : i32
    %c0_i32_0 = arith.constant 0 : i32
    return %arg0, %c0_i32 : i32, i32
  }
  func.func @transform_1(%arg0: i32) -> (i32, i32) {
    %c0_i32 = arith.constant 0 : i32
    %c0_i32_0 = arith.constant 0 : i32
    %c0_i32_1 = arith.constant 0 : i32
    return %c0_i32, %c0_i32_0 : i32, i32
  }
  func.func @transform_2(%arg0: i32) -> (i32, i32) {
    %c0_i32 = arith.constant 0 : i32
    %c0_i32_0 = arith.constant 0 : i32
    %c0_i32_1 = arith.constant 0 : i32
    return %c0_i32, %c0_i32_0 : i32, i32
  }
  func.func @transform_3(%arg0: i32) -> (i32, i32) {
    %c0_i32 = arith.constant 0 : i32
    %c0_i32_0 = arith.constant 0 : i32
    return %arg0, %c0_i32 : i32, i32
  }
}

</mosaic_0001>

<llo_original>
// kernel: tpu_custom_call.1
$region0: #{tpu_custom_call.1}
  #allocation0 [shape = 'u32[]', space=smem, size = 0x4, offset = 0x4, fixed_abs, tag = 'smem constant byte address 0x4 - core index']
  #allocation1 [shape = 'u32[72,128]{1,0:T(1,128)}', space=vmem, size = 0x9000, scoped, tag = 'internal scratch']
  %s0 = inlined_call_operand.vmem [shape: f32[512,3], index: 0, kind: input, shape index: {}]
  %s1 = inlined_call_operand.vmem [shape: f32[1,3], index: 1, kind: input, shape index: {}]
  %s2 = inlined_call_operand.vmem [shape: f32[1,3], index: 2, kind: input, shape index: {}]
  %s3 = inlined_call_operand.vmem [shape: f32[512,3], index: 3, kind: output, shape index: {}]
  %s4 = sld [smem:[#allocation0]]
  $region22: #{tpu_custom_call.1} parent=0
    _
  %s6 = ssub.s32 1, %s4
  %s7 = scalar_select 0, %s6, %s4
  // Predicated region
  $region2: #{tpu_custom_call.1} parent=0 // pred_check
    _
  $region3: #{tpu_custom_call.1} parent=0 // pred_check_branch
    %9 = sbr.rel (0) target = $region5
  $region4: #{tpu_custom_call.1} parent=0 // pred_region
    _
  $region5: #{tpu_custom_call.1} parent=0 // pred_fallthru
    _
  // Predicated region
  $region6: #{tpu_custom_call.1} parent=0 // pred_check
    _
  $region7: #{tpu_custom_call.1} parent=0 // pred_check_branch
    %11 = sbr.rel (0) target = $region9
  $region8: #{tpu_custom_call.1} parent=0 // pred_region
    _
  $region9: #{tpu_custom_call.1} parent=0 // pred_fallthru
    _
  // Predicated region
  $region10: #{tpu_custom_call.1} parent=0 // pred_check
    _
  $region11: #{tpu_custom_call.1} parent=0 // pred_check_branch
    %13 = sbr.rel (0) target = $region13
  $region12: #{tpu_custom_call.1} parent=0 // pred_region
    _
  $region13: #{tpu_custom_call.1} parent=0 // pred_fallthru
    _
  %v14 = vld [vmem:[%s0] sm:$0xff]
  %v15 = vld [vmem:[%s0 + $0x8] sm:$0xff]
  %v16 = vld [vmem:[%s0 + $0x10] sm:$0xff]
  %v17 = vld [vmem:[%s0 + $0x18] sm:$0xff]
  %v18 = vld [vmem:[%s0 + $0x20] sm:$0xff]
  %v19 = vld [vmem:[%s0 + $0x28] sm:$0xff]
  %v20 = vld [vmem:[%s0 + $0x30] sm:$0xff]
  %v21 = vld [vmem:[%s0 + $0x38] sm:$0xff]
  %v22 = vld [vmem:[%s0 + $0x40] sm:$0xff]
  %v23 = vld [vmem:[%s0 + $0x48] sm:$0xff]
  %v24 = vld [vmem:[%s0 + $0x50] sm:$0xff]
  %v25 = vld [vmem:[%s0 + $0x58] sm:$0xff]
  %v26 = vld [vmem:[%s0 + $0x60] sm:$0xff]
  %v27 = vld [vmem:[%s0 + $0x68] sm:$0xff]
  %v28 = vld [vmem:[%s0 + $0x70] sm:$0xff]
  %v29 = vld [vmem:[%s0 + $0x78] sm:$0xff]
  %v30 = vld [vmem:[%s0 + $0x80] sm:$0xff]
  %v31 = vld [vmem:[%s0 + $0x88] sm:$0xff]
  %v32 = vld [vmem:[%s0 + $0x90] sm:$0xff]
  %v33 = vld [vmem:[%s0 + $0x98] sm:$0xff]
  %v34 = vld [vmem:[%s0 + $0xa0] sm:$0xff]
  %v35 = vld [vmem:[%s0 + $0xa8] sm:$0xff]
  %v36 = vld [vmem:[%s0 + $0xb0] sm:$0xff]
  %v37 = vld [vmem:[%s0 + $0xb8] sm:$0xff]
  %v38 = vld [vmem:[%s0 + $0xc0] sm:$0xff]
  %v39 = vld [vmem:[%s0 + $0xc8] sm:$0xff]
  %v40 = vld [vmem:[%s0 + $0xd0] sm:$0xff]
  %v41 = vld [vmem:[%s0 + $0xd8] sm:$0xff]
  %v42 = vld [vmem:[%s0 + $0xe0] sm:$0xff]
  %v43 = vld [vmem:[%s0 + $0xe8] sm:$0xff]
  %v44 = vld [vmem:[%s0 + $0xf0] sm:$0xff]
  %v45 = vld [vmem:[%s0 + $0xf8] sm:$0xff]
  %v46 = vld [vmem:[%s0 + $0x100] sm:$0xff]
  %v47 = vld [vmem:[%s0 + $0x108] sm:$0xff]
  %v48 = vld [vmem:[%s0 + $0x110] sm:$0xff]
  %v49 = vld [vmem:[%s0 + $0x118] sm:$0xff]
  %v50 = vld [vmem:[%s0 + $0x120] sm:$0xff]
  %v51 = vld [vmem:[%s0 + $0x128] sm:$0xff]
  %v52 = vld [vmem:[%s0 + $0x130] sm:$0xff]
  %v53 = vld [vmem:[%s0 + $0x138] sm:$0xff]
  %v54 = vld [vmem:[%s0 + $0x140] sm:$0xff]
  %v55 = vld [vmem:[%s0 + $0x148] sm:$0xff]
  %v56 = vld [vmem:[%s0 + $0x150] sm:$0xff]
  %v57 = vld [vmem:[%s0 + $0x158] sm:$0xff]
  %v58 = vld [vmem:[%s0 + $0x160] sm:$0xff]
  %v59 = vld [vmem:[%s0 + $0x168] sm:$0xff]
  %v60 = vld [vmem:[%s0 + $0x170] sm:$0xff]
  %v61 = vld [vmem:[%s0 + $0x178] sm:$0xff]
  %v62 = vld [vmem:[%s0 + $0x180] sm:$0xff]
  %v63 = vld [vmem:[%s0 + $0x188] sm:$0xff]
  %v64 = vld [vmem:[%s0 + $0x190] sm:$0xff]
  %v65 = vld [vmem:[%s0 + $0x198] sm:$0xff]
  %v66 = vld [vmem:[%s0 + $0x1a0] sm:$0xff]
  %v67 = vld [vmem:[%s0 + $0x1a8] sm:$0xff]
  %v68 = vld [vmem:[%s0 + $0x1b0] sm:$0xff]
  %v69 = vld [vmem:[%s0 + $0x1b8] sm:$0xff]
  %v70 = vld [vmem:[%s0 + $0x1c0] sm:$0xff]
  %v71 = vld [vmem:[%s0 + $0x1c8] sm:$0xff]
  %v72 = vld [vmem:[%s0 + $0x1d0] sm:$0xff]
  %v73 = vld [vmem:[%s0 + $0x1d8] sm:$0xff]
  %v74 = vld [vmem:[%s0 + $0x1e0] sm:$0xff]
  %v75 = vld [vmem:[%s0 + $0x1e8] sm:$0xff]
  %v76 = vld [vmem:[%s0 + $0x1f0] sm:$0xff]
  %v77 = vld [vmem:[%s0 + $0x1f8] sm:$0xff]
  %v78 = vld [vmem:[%s1] sm:$0x1]
  %v80 = vperm.slane %v78, 0
  %v82 = vmul.f32 %v14, %v80
  %v83 = vmul.f32 %v15, %v80
  %v84 = vmul.f32 %v16, %v80
  %v85 = vmul.f32 %v17, %v80
  %v86 = vmul.f32 %v18, %v80
  %v87 = vmul.f32 %v19, %v80
  %v88 = vmul.f32 %v20, %v80
  %v89 = vmul.f32 %v21, %v80
  %v90 = vmul.f32 %v22, %v80
  %v91 = vmul.f32 %v23, %v80
  %v92 = vmul.f32 %v24, %v80
  %v93 = vmul.f32 %v25, %v80
  %v94 = vmul.f32 %v26, %v80
  %v95 = vmul.f32 %v27, %v80
  %v96 = vmul.f32 %v28, %v80
  %v97 = vmul.f32 %v29, %v80
  %v98 = vmul.f32 %v30, %v80
  %v99 = vmul.f32 %v31, %v80
  %v100 = vmul.f32 %v32, %v80
  %v101 = vmul.f32 %v33, %v80
  %v102 = vmul.f32 %v34, %v80
  %v103 = vmul.f32 %v35, %v80
  %v104 = vmul.f32 %v36, %v80
  %v105 = vmul.f32 %v37, %v80
  %v106 = vmul.f32 %v38, %v80
  %v107 = vmul.f32 %v39, %v80
  %v108 = vmul.f32 %v40, %v80
  %v109 = vmul.f32 %v41, %v80
  %v110 = vmul.f32 %v42, %v80
  %v111 = vmul.f32 %v43, %v80
  %v112 = vmul.f32 %v44, %v80
  %v113 = vmul.f32 %v45, %v80
  %v114 = vmul.f32 %v46, %v80
  %v115 = vmul.f32 %v47, %v80
  %v116 = vmul.f32 %v48, %v80
  %v117 = vmul.f32 %v49, %v80
  %v118 = vmul.f32 %v50, %v80
  %v119 = vmul.f32 %v51, %v80
  %v120 = vmul.f32 %v52, %v80
  %v121 = vmul.f32 %v53, %v80
  %v122 = vmul.f32 %v54, %v80
  %v123 = vmul.f32 %v55, %v80
  %v124 = vmul.f32 %v56, %v80
  %v125 = vmul.f32 %v57, %v80
  %v126 = vmul.f32 %v58, %v80
  %v127 = vmul.f32 %v59, %v80
  %v128 = vmul.f32 %v60, %v80
  %v129 = vmul.f32 %v61, %v80
  %v130 = vmul.f32 %v62, %v80
  %v131 = vmul.f32 %v63, %v80
  %v132 = vmul.f32 %v64, %v80
  %v133 = vmul.f32 %v65, %v80
  %v134 = vmul.f32 %v66, %v80
  %v135 = vmul.f32 %v67, %v80
  %v136 = vmul.f32 %v68, %v80
  %v137 = vmul.f32 %v69, %v80
  %v138 = vmul.f32 %v70, %v80
  %v139 = vmul.f32 %v71, %v80
  %v140 = vmul.f32 %v72, %v80
  %v141 = vmul.f32 %v73, %v80
  %v142 = vmul.f32 %v74, %v80
  %v143 = vmul.f32 %v75, %v80
  %v144 = vmul.f32 %v76, %v80
  %v145 = vmul.f32 %v77, %v80
  %v146 = vld [vmem:[%s2] sm:$0x1]
  %v148 = vperm.slane %v146, 0
  %v150 = vadd.f32 %v82, %v148
  %v151 = vadd.f32 %v83, %v148
  %v152 = vadd.f32 %v84, %v148
  %v153 = vadd.f32 %v85, %v148
  %v154 = vadd.f32 %v86, %v148
  %v155 = vadd.f32 %v87, %v148
  %v156 = vadd.f32 %v88, %v148
  %v157 = vadd.f32 %v89, %v148
  %v158 = vadd.f32 %v90, %v148
  %v159 = vadd.f32 %v91, %v148
  %v160 = vadd.f32 %v92, %v148
  %v161 = vadd.f32 %v93, %v148
  %v162 = vadd.f32 %v94, %v148
  %v163 = vadd.f32 %v95, %v148
  %v164 = vadd.f32 %v96, %v148
  %v165 = vadd.f32 %v97, %v148
  %v166 = vadd.f32 %v98, %v148
  %v167 = vadd.f32 %v99, %v148
  %v168 = vadd.f32 %v100, %v148
  %v169 = vadd.f32 %v101, %v148
  %v170 = vadd.f32 %v102, %v148
  %v171 = vadd.f32 %v103, %v148
  %v172 = vadd.f32 %v104, %v148
  %v173 = vadd.f32 %v105, %v148
  %v174 = vadd.f32 %v106, %v148
  %v175 = vadd.f32 %v107, %v148
  %v176 = vadd.f32 %v108, %v148
  %v177 = vadd.f32 %v109, %v148
  %v178 = vadd.f32 %v110, %v148
  %v179 = vadd.f32 %v111, %v148
  %v180 = vadd.f32 %v112, %v148
  %v181 = vadd.f32 %v113, %v148
  %v182 = vadd.f32 %v114, %v148
  %v183 = vadd.f32 %v115, %v148
  %v184 = vadd.f32 %v116, %v148
  %v185 = vadd.f32 %v117, %v148
  %v186 = vadd.f32 %v118, %v148
  %v187 = vadd.f32 %v119, %v148
  %v188 = vadd.f32 %v120, %v148
  %v189 = vadd.f32 %v121, %v148
  %v190 = vadd.f32 %v122, %v148
  %v191 = vadd.f32 %v123, %v148
  %v192 = vadd.f32 %v124, %v148
  %v193 = vadd.f32 %v125, %v148
  %v194 = vadd.f32 %v126, %v148
  %v195 = vadd.f32 %v127, %v148
  %v196 = vadd.f32 %v128, %v148
  %v197 = vadd.f32 %v129, %v148
  %v198 = vadd.f32 %v130, %v148
  %v199 = vadd.f32 %v131, %v148
  %v200 = vadd.f32 %v132, %v148
  %v201 = vadd.f32 %v133, %v148
  %v202 = vadd.f32 %v134, %v148
  %v203 = vadd.f32 %v135, %v148
  %v204 = vadd.f32 %v136, %v148
  %v205 = vadd.f32 %v137, %v148
  %v206 = vadd.f32 %v138, %v148
  %v207 = vadd.f32 %v139, %v148
  %v208 = vadd.f32 %v140, %v148
  %v209 = vadd.f32 %v141, %v148
  %v210 = vadd.f32 %v142, %v148
  %v211 = vadd.f32 %v143, %v148
  %v212 = vadd.f32 %v144, %v148
  %v213 = vadd.f32 %v145, %v148
  %vm214 = vcmask 23552
  %215 = vst.msk [vmem:[%s3] sm:$0xff] %vm214, %v150
  %216 = vst.msk [vmem:[%s3 + $0x8] sm:$0xff] %vm214, %v151
  %217 = vst.msk [vmem:[%s3 + $0x10] sm:$0xff] %vm214, %v152
  %218 = vst.msk [vmem:[%s3 + $0x18] sm:$0xff] %vm214, %v153
  %219 = vst.msk [vmem:[%s3 + $0x20] sm:$0xff] %vm214, %v154
  %220 = vst.msk [vmem:[%s3 + $0x28] sm:$0xff] %vm214, %v155
  %221 = vst.msk [vmem:[%s3 + $0x30] sm:$0xff] %vm214, %v156
  %222 = vst.msk [vmem:[%s3 + $0x38] sm:$0xff] %vm214, %v157
  %223 = vst.msk [vmem:[%s3 + $0x40] sm:$0xff] %vm214, %v158
  %224 = vst.msk [vmem:[%s3 + $0x48] sm:$0xff] %vm214, %v159
  %225 = vst.msk [vmem:[%s3 + $0x50] sm:$0xff] %vm214, %v160
  %226 = vst.msk [vmem:[%s3 + $0x58] sm:$0xff] %vm214, %v161
  %227 = vst.msk [vmem:[%s3 + $0x60] sm:$0xff] %vm214, %v162
  %228 = vst.msk [vmem:[%s3 + $0x68] sm:$0xff] %vm214, %v163
  %229 = vst.msk [vmem:[%s3 + $0x70] sm:$0xff] %vm214, %v164
  %230 = vst.msk [vmem:[%s3 + $0x78] sm:$0xff] %vm214, %v165
  %231 = vst.msk [vmem:[%s3 + $0x80] sm:$0xff] %vm214, %v166
  %232 = vst.msk [vmem:[%s3 + $0x88] sm:$0xff] %vm214, %v167
  %233 = vst.msk [vmem:[%s3 + $0x90] sm:$0xff] %vm214, %v168
  %234 = vst.msk [vmem:[%s3 + $0x98] sm:$0xff] %vm214, %v169
  %235 = vst.msk [vmem:[%s3 + $0xa0] sm:$0xff] %vm214, %v170
  %236 = vst.msk [vmem:[%s3 + $0xa8] sm:$0xff] %vm214, %v171
  %237 = vst.msk [vmem:[%s3 + $0xb0] sm:$0xff] %vm214, %v172
  %238 = vst.msk [vmem:[%s3 + $0xb8] sm:$0xff] %vm214, %v173
  %239 = vst.msk [vmem:[%s3 + $0xc0] sm:$0xff] %vm214, %v174
  %240 = vst.msk [vmem:[%s3 + $0xc8] sm:$0xff] %vm214, %v175
  %241 = vst.msk [vmem:[%s3 + $0xd0] sm:$0xff] %vm214, %v176
  %242 = vst.msk [vmem:[%s3 + $0xd8] sm:$0xff] %vm214, %v177
  %243 = vst.msk [vmem:[%s3 + $0xe0] sm:$0xff] %vm214, %v178
  %244 = vst.msk [vmem:[%s3 + $0xe8] sm:$0xff] %vm214, %v179
  %245 = vst.msk [vmem:[%s3 + $0xf0] sm:$0xff] %vm214, %v180
  %246 = vst.msk [vmem:[%s3 + $0xf8] sm:$0xff] %vm214, %v181
  %247 = vst.msk [vmem:[%s3 + $0x100] sm:$0xff] %vm214, %v182
  %248 = vst.msk [vmem:[%s3 + $0x108] sm:$0xff] %vm214, %v183
  %249 = vst.msk [vmem:[%s3 + $0x110] sm:$0xff] %vm214, %v184
  %250 = vst.msk [vmem:[%s3 + $0x118] sm:$0xff] %vm214, %v185
  %251 = vst.msk [vmem:[%s3 + $0x120] sm:$0xff] %vm214, %v186
  %252 = vst.msk [vmem:[%s3 + $0x128] sm:$0xff] %vm214, %v187
  %253 = vst.msk [vmem:[%s3 + $0x130] sm:$0xff] %vm214, %v188
  %254 = vst.msk [vmem:[%s3 + $0x138] sm:$0xff] %vm214, %v189
  %255 = vst.msk [vmem:[%s3 + $0x140] sm:$0xff] %vm214, %v190
  %256 = vst.msk [vmem:[%s3 + $0x148] sm:$0xff] %vm214, %v191
  %257 = vst.msk [vmem:[%s3 + $0x150] sm:$0xff] %vm214, %v192
  %258 = vst.msk [vmem:[%s3 + $0x158] sm:$0xff] %vm214, %v193
  %259 = vst.msk [vmem:[%s3 + $0x160] sm:$0xff] %vm214, %v194
  %260 = vst.msk [vmem:[%s3 + $0x168] sm:$0xff] %vm214, %v195
  %261 = vst.msk [vmem:[%s3 + $0x170] sm:$0xff] %vm214, %v196
  %262 = vst.msk [vmem:[%s3 + $0x178] sm:$0xff] %vm214, %v197
  %263 = vst.msk [vmem:[%s3 + $0x180] sm:$0xff] %vm214, %v198
  %264 = vst.msk [vmem:[%s3 + $0x188] sm:$0xff] %vm214, %v199
  %265 = vst.msk [vmem:[%s3 + $0x190] sm:$0xff] %vm214, %v200
  %266 = vst.msk [vmem:[%s3 + $0x198] sm:$0xff] %vm214, %v201
  %267 = vst.msk [vmem:[%s3 + $0x1a0] sm:$0xff] %vm214, %v202
  %268 = vst.msk [vmem:[%s3 + $0x1a8] sm:$0xff] %vm214, %v203
  %269 = vst.msk [vmem:[%s3 + $0x1b0] sm:$0xff] %vm214, %v204
  %270 = vst.msk [vmem:[%s3 + $0x1b8] sm:$0xff] %vm214, %v205
  %271 = vst.msk [vmem:[%s3 + $0x1c0] sm:$0xff] %vm214, %v206
  %272 = vst.msk [vmem:[%s3 + $0x1c8] sm:$0xff] %vm214, %v207
  %273 = vst.msk [vmem:[%s3 + $0x1d0] sm:$0xff] %vm214, %v208
  %274 = vst.msk [vmem:[%s3 + $0x1d8] sm:$0xff] %vm214, %v209
  %275 = vst.msk [vmem:[%s3 + $0x1e0] sm:$0xff] %vm214, %v210
  %276 = vst.msk [vmem:[%s3 + $0x1e8] sm:$0xff] %vm214, %v211
  %277 = vst.msk [vmem:[%s3 + $0x1f0] sm:$0xff] %vm214, %v212
  %278 = vst.msk [vmem:[%s3 + $0x1f8] sm:$0xff] %vm214, %v213
  // Predicated region
  $region14: #{tpu_custom_call.1} parent=0 // pred_check
    _
  $region15: #{tpu_custom_call.1} parent=0 // pred_check_branch
    %280 = sbr.rel (0) target = $region17
  $region16: #{tpu_custom_call.1} parent=0 // pred_region
    _
  $region17: #{tpu_custom_call.1} parent=0 // pred_fallthru
    _
  // Predicated region
  $region18: #{tpu_custom_call.1} parent=0 // pred_check
    _
  $region19: #{tpu_custom_call.1} parent=0 // pred_check_branch
    %282 = sbr.rel (0) target = $region21
  $region20: #{tpu_custom_call.1} parent=0 // pred_region
    _
  $region21: #{tpu_custom_call.1} parent=0 // pred_fallthru
    _

</llo_original>
